<compile_context>
chip_gen: v7x
topology: tpu7x:2x2x1
jax: 0.10.0
libtpu: 0.0.40
codegen_flags: <defaults>
</compile_context>

<pallas_src>
import functools

import jax
import jax.numpy as jnp
from jax.experimental import pallas as pl
from jax.experimental.pallas import tpu as pltpu


def _round_up(x, m):
    return ((x + m - 1) // m) * m


def _dueling_kernel(x_ref, w_ref, wout_ref, b_ref, out_ref, *,
                    n_actions, hidden, s_pad, n_pad, inv_ba):
    H = hidden
    A = n_actions

    x = x_ref[0]                                              # (B, Sp) f32, ones col at S

    # Static, tile-aligned views; bf16 slabs upcast to f32 so the whole math
    # path (MXU accumulation included) stays f32.
    w1 = w_ref[0:s_pad, 0:H].astype(jnp.float32)              # (Sp, H), b1 folded in
    w_hid = w_ref[s_pad:s_pad + H, 0:2 * H].astype(jnp.float32)   # (H, 2H) = [wa1 | wv1]
    w_out = wout_ref[...].astype(jnp.float32)                 # (2H, Np) = blkdiag(wa2, wv2)
    b_hid = b_ref[0:1, 0:2 * H].astype(jnp.float32)           # (1, 2H) = [ba1 | bv1]
    b_out = b_ref[1:2, 0:n_pad].astype(jnp.float32)           # (1, Np) = [ba2 | bv2 | 0...]

    # hidden_layer: Linear (bias folded via ones column) + ReLU
    h = jnp.maximum(jnp.dot(x, w1, preferred_element_type=jnp.float32), 0.0)   # (B, H)

    # fused first Linear+ReLU of the advantage & value branches
    hv = jnp.dot(h, w_hid, preferred_element_type=jnp.float32) + b_hid
    hv = jnp.maximum(hv, 0.0)                                  # (B, 2H) = [ah | vh]

    # fused output Linear of both branches:
    # columns [0, A) = advantage, column A = value, columns > A stay exactly 0.
    av = jnp.dot(hv, w_out, preferred_element_type=jnp.float32) + b_out        # (B, Np)

    # Global advantage.mean() over (batch, actions) of THIS forward call:
    # lane-masked sum * precomputed 1/(B*A).  No row mask needed (B not padded).
    col = jax.lax.broadcasted_iota(jnp.int32, av.shape, 1)
    adv_mean = jnp.sum(jnp.where(col < A, av, 0.0)) * inv_ba

    # value column via lane-masked row reduce, broadcast over all action lanes.
    val = jnp.sum(jnp.where(col == A, av, 0.0), axis=1, keepdims=True)         # (B, 1)

    # Lane-dense 128-wide store; columns >= A are padding sliced off outside.
    out_ref[0] = av + val - adv_mean


def pack_dueling_params(params, n_states, n_actions, hidden_dim,
                        dtype=jnp.bfloat16):
    """Pack the 10 Linear weights/biases into:
         w_main (Sp+H, 2H)  : [w1 | b1-row | pad] rows 0..Sp-1, [wa1 | wv1] rows Sp..Sp+H-1
         w_out  (2H, n_pad) : blockdiag(wa2, wv2)  (tight, no wide zero padding)
         b_slab (2, max(2H, n_pad)) : row0 = [ba1 | bv1], row1 = [ba2 | bv2 | 0...]
       All stored in bf16 (upcast in-kernel)."""
    H = hidden_dim
    A = n_actions
    n_pad = 128 * pl.cdiv(A + 1, 128)            # lane-dense output width
    s_pad = _round_up(n_states + 1, 8)           # +1 ones column for folded b1
    bw = max(2 * H, n_pad)

    w_main = jnp.zeros((s_pad + H, 2 * H), jnp.float32)
    w_main = w_main.at[0:n_states, 0:H].set(params["w1"])
    w_main = w_main.at[n_states:n_states + 1, 0:H].set(params["b1"])   # folded bias row
    w_main = w_main.at[s_pad:s_pad + H, 0:H].set(params["wa1"])
    w_main = w_main.at[s_pad:s_pad + H, H:2 * H].set(params["wv1"])

    w_out = jnp.zeros((2 * H, n_pad), jnp.float32)
    w_out = w_out.at[0:H, 0:A].set(params["wa2"])
    w_out = w_out.at[H:2 * H, A:A + 1].set(params["wv2"])

    b_slab = jnp.zeros((2, bw), jnp.float32)
    b_slab = b_slab.at[0:1, 0:H].set(params["ba1"])
    b_slab = b_slab.at[0:1, H:2 * H].set(params["bv1"])
    b_slab = b_slab.at[1:2, 0:A].set(params["ba2"])
    b_slab = b_slab.at[1:2, A:A + 1].set(params["bv2"])

    meta = dict(n_states=n_states, n_actions=A, hidden=H, s_pad=s_pad, n_pad=n_pad)
    return w_main.astype(dtype), w_out.astype(dtype), b_slab.astype(dtype), meta


def dueling_forward_chunked(xs, w_main, w_out, b_slab, meta):
    """T independent forward calls: xs is (T, B, n_states).  Weights/biases are
    DMA'd once and stay VMEM-resident across the grid; each chunk computes its
    own global advantage mean (torch semantics per forward call)."""
    T, B, S = xs.shape
    A = meta["n_actions"]
    H = meta["hidden"]
    Sp = meta["s_pad"]
    n_pad = meta["n_pad"]

    # Append ones column (folded b1) and zero-pad K to Sp (multiple of 8).
    xp = jnp.concatenate(
        [xs.astype(jnp.float32),
         jnp.ones((T, B, 1), jnp.float32),
         jnp.zeros((T, B, Sp - S - 1), jnp.float32)], axis=-1)          # (T, B, Sp)

    kernel = functools.partial(_dueling_kernel,
                               n_actions=A, hidden=H, s_pad=Sp, n_pad=n_pad,
                               inv_ba=1.0 / (B * A))

    out_padded = pl.pallas_call(
        kernel,
        out_shape=jax.ShapeDtypeStruct((T, B, n_pad), jnp.float32),
        grid_spec=pltpu.PrefetchScalarGridSpec(
            num_scalar_prefetch=0,
            grid=(T,),
            in_specs=[
                pl.BlockSpec((1, B, Sp), lambda t: (t, 0, 0)),          # per-chunk x
                pl.BlockSpec(w_main.shape, lambda t: (0, 0)),           # resident weights
                pl.BlockSpec(w_out.shape, lambda t: (0, 0)),            # resident weights
                pl.BlockSpec(b_slab.shape, lambda t: (0, 0)),           # resident biases
            ],
            out_specs=pl.BlockSpec((1, B, n_pad), lambda t: (t, 0, 0)),
        ),
        compiler_params=pltpu.CompilerParams(
            dimension_semantics=("parallel",)),                          # v7x: 2 TCs
    )(xp, w_main, w_out, b_slab)

    return out_padded[:, :, :A]


def dueling_forward(x, w_main, w_out, b_slab, meta):
    """Single forward call on a (B, n_states) batch — equivalent to DuelingNet.forward."""
    return dueling_forward_chunked(x[None], w_main, w_out, b_slab, meta)[0]


def init_params(key, n_states, n_actions, hidden_dim):
    """Deterministic init mimicking torch.nn.Linear default (uniform +/- 1/sqrt(fan_in)).
    Weights stored (in_features, out_features), i.e. transposed vs torch."""
    def linear(key, fan_in, fan_out):
        kw, kb = jax.random.split(key)
        bound = 1.0 / (fan_in ** 0.5)
        w = jax.random.uniform(kw, (fan_in, fan_out), jnp.float32, -bound, bound)
        b = jax.random.uniform(kb, (1, fan_out), jnp.float32, -bound, bound)
        return w, b

    keys = jax.random.split(key, 5)
    w1, b1 = linear(keys[0], n_states, hidden_dim)
    wa1, ba1 = linear(keys[1], hidden_dim, hidden_dim)
    wa2, ba2 = linear(keys[2], hidden_dim, n_actions)
    wv1, bv1 = linear(keys[3], hidden_dim, hidden_dim)
    wv2, bv2 = linear(keys[4], hidden_dim, 1)
    return dict(w1=w1, b1=b1, wa1=wa1, ba1=ba1, wa2=wa2, ba2=ba2,
                wv1=wv1, bv1=bv1, wv2=wv2, bv2=bv2)


def dueling_forward_ref(x, p):
    """Pure-JAX reference of the torch forward for verification."""
    h = jnp.maximum(x @ p["w1"] + p["b1"], 0.0)
    ah = jnp.maximum(h @ p["wa1"] + p["ba1"], 0.0)
    adv = ah @ p["wa2"] + p["ba2"]
    vh = jnp.maximum(h @ p["wv1"] + p["bv1"], 0.0)
    val = vh @ p["wv2"] + p["bv2"]
    return val + adv - jnp.mean(adv)


if __name__ == "__main__":
    # module default hidden_dim=128; small RL-style state/action dims
    B, n_states, n_actions, hidden_dim = 2, 8, 4, 128
    T = 4   # number of independent forward calls batched through one pallas_call

    key = jax.random.PRNGKey(0)
    k_params, k_x, k_xs = jax.random.split(key, 3)
    params = init_params(k_params, n_states, n_actions, hidden_dim)
    x = jax.random.normal(k_x, (B, n_states), jnp.float32)
    xs = jax.random.normal(k_xs, (T, B, n_states), jnp.float32)

    w_main, w_out, b_slab, meta = pack_dueling_params(
        params, n_states, n_actions, hidden_dim)

    # Single forward call (grid of 1).
    out = jax.block_until_ready(dueling_forward(x, w_main, w_out, b_slab, meta))
    # T independent forward calls, weights resident across the grid.
    outs = jax.block_until_ready(
        dueling_forward_chunked(xs, w_main, w_out, b_slab, meta))

    # Verification: tight vs a reference using the bf16-quantized params (what the
    # kernel actually computes), loose vs the full-f32 reference (bf16 weight
    # quantization is intentional per the perf review).
    params_q = {k: v.astype(jnp.bfloat16).astype(jnp.float32)
                for k, v in params.items()}
    ref_q = dueling_forward_ref(x, params_q)
    ref_f = dueling_forward_ref(x, params)
    assert out.shape == (B, n_actions)
    assert jnp.allclose(out, ref_q, atol=1e-3, rtol=1e-3), (out, ref_q)
    assert jnp.allclose(out, ref_f, atol=1e-1, rtol=1e-1), (out, ref_f)

    refs_q = jnp.stack([dueling_forward_ref(xs[t], params_q) for t in range(T)])
    assert outs.shape == (T, B, n_actions)
    assert jnp.allclose(outs, refs_q, atol=1e-3, rtol=1e-3), (outs, refs_q)

    print("KERNEL_OK")
</pallas_src>

<mosaic_0001>
module attributes {stable_mosaic.version = 11 : i64} {
  func.func @_dueling_kernel(%arg0: i32, %arg1: memref<1x2x16xf32, #tpu.memory_space<vmem>>, %arg2: memref<144x256xbf16, #tpu.memory_space<vmem>>, %arg3: memref<256x128xbf16, #tpu.memory_space<vmem>>, %arg4: memref<2x256xbf16, #tpu.memory_space<vmem>>, %arg5: memref<1x2x128xf32, #tpu.memory_space<vmem>>) attributes {dimension_semantics = [#tpu.dimension_semantics<parallel>], iteration_bounds = array<i64: 1>, scalar_prefetch = 0 : i64, scratch_operands = 0 : i64, tpu.core_type = #tpu.core_type<tc>, window_params = [{transform_indices = @transform_0, window_bounds = array<i64: 1, 2, 16>}, {pipeline_mode = #tpu.pipeline_mode<synchronous>, transform_indices = @transform_1, window_bounds = array<i64: 144, 256>}, {pipeline_mode = #tpu.pipeline_mode<synchronous>, transform_indices = @transform_2, window_bounds = array<i64: 256, 128>}, {pipeline_mode = #tpu.pipeline_mode<synchronous>, transform_indices = @transform_3, window_bounds = array<i64: 2, 256>}, {transform_indices = @transform_4, window_bounds = array<i64: 1, 2, 128>}]} {
    %c0 = arith.constant 0 : index
    %c0_0 = arith.constant 0 : index
    %c0_1 = arith.constant 0 : index
    %0 = vector.load %arg1[%c0, %c0_0, %c0_1] : memref<1x2x16xf32, #tpu.memory_space<vmem>>, vector<1x2x16xf32>
    %1 = vector.shape_cast %0 : vector<1x2x16xf32> to vector<2x16xf32>
    %c0_2 = arith.constant 0 : index
    %c0_3 = arith.constant 0 : index
    %2 = vector.load %arg2[%c0_2, %c0_3] : memref<144x256xbf16, #tpu.memory_space<vmem>>, vector<16x128xbf16>
    %3 = arith.extf %2 : vector<16x128xbf16> to vector<16x128xf32>
    %c16 = arith.constant 16 : index
    %c0_4 = arith.constant 0 : index
    %4 = vector.load %arg2[%c16, %c0_4] : memref<144x256xbf16, #tpu.memory_space<vmem>>, vector<128x256xbf16>
    %5 = arith.extf %4 : vector<128x256xbf16> to vector<128x256xf32>
    %c0_5 = arith.constant 0 : index
    %c0_6 = arith.constant 0 : index
    %6 = vector.load %arg3[%c0_5, %c0_6] : memref<256x128xbf16, #tpu.memory_space<vmem>>, vector<256x128xbf16>
    %7 = arith.extf %6 : vector<256x128xbf16> to vector<256x128xf32>
    %c0_7 = arith.constant 0 : index
    %c0_8 = arith.constant 0 : index
    %8 = vector.load %arg4[%c0_7, %c0_8] : memref<2x256xbf16, #tpu.memory_space<vmem>>, vector<1x256xbf16>
    %9 = arith.extf %8 : vector<1x256xbf16> to vector<1x256xf32>
    %c1 = arith.constant 1 : index
    %c0_9 = arith.constant 0 : index
    %10 = vector.load %arg4[%c1, %c0_9] : memref<2x256xbf16, #tpu.memory_space<vmem>>, vector<1x128xbf16>
    %11 = arith.extf %10 : vector<1x128xbf16> to vector<1x128xf32>
    %cst = arith.constant dense<0.000000e+00> : vector<2x128xf32>
    %12 = tpu.matmul %1, %3, %cst {dimension_numbers = #tpu.dot_dimension_numbers<[1], [0], [0], [1], [0, 0, 1, 1], [], []>} : vector<2x16xf32>, vector<16x128xf32>, vector<2x128xf32> -> vector<2x128xf32>
    %cst_10 = arith.constant 0.000000e+00 : f32
    %13 = vector.broadcast %cst_10 : f32 to vector<2x128xf32>
    %14 = arith.maximumf %12, %13 : vector<2x128xf32>
    %cst_11 = arith.constant dense<0.000000e+00> : vector<2x256xf32>
    %15 = tpu.matmul %14, %5, %cst_11 {dimension_numbers = #tpu.dot_dimension_numbers<[1], [0], [0], [1], [0, 0, 1, 1], [], []>} : vector<2x128xf32>, vector<128x256xf32>, vector<2x256xf32> -> vector<2x256xf32>
    %16 = vector.broadcast %9 : vector<1x256xf32> to vector<2x256xf32>
    %17 = arith.addf %15, %16 : vector<2x256xf32>
    %cst_12 = arith.constant 0.000000e+00 : f32
    %18 = vector.broadcast %cst_12 : f32 to vector<2x256xf32>
    %19 = arith.maximumf %17, %18 : vector<2x256xf32>
    %cst_13 = arith.constant dense<0.000000e+00> : vector<2x128xf32>
    %20 = tpu.matmul %19, %7, %cst_13 {dimension_numbers = #tpu.dot_dimension_numbers<[1], [0], [0], [1], [0, 0, 1, 1], [], []>} : vector<2x256xf32>, vector<256x128xf32>, vector<2x128xf32> -> vector<2x128xf32>
    %21 = vector.broadcast %11 : vector<1x128xf32> to vector<2x128xf32>
    %22 = arith.addf %20, %21 : vector<2x128xf32>
    %23 = tpu.iota {dimensions = array<i32: 1>} : vector<2x128xi32>
    %c4_i32 = arith.constant 4 : i32
    %24 = vector.broadcast %c4_i32 : i32 to vector<2x128xi32>
    %25 = arith.cmpi slt, %23, %24 : vector<2x128xi32>
    %cst_14 = arith.constant 0.000000e+00 : f32
    %26 = vector.broadcast %cst_14 : f32 to vector<2x128xf32>
    %27 = arith.select %25, %22, %26 : vector<2x128xi1>, vector<2x128xf32>
    %28 = vector.shape_cast %27 : vector<2x128xf32> to vector<1x2x128xf32>
    %cst_15 = arith.constant dense<0.000000e+00> : vector<1xf32>
    %29 = vector.multi_reduction <add>, %28, %cst_15 [1, 2] : vector<1x2x128xf32> to vector<1xf32>
    %30 = vector.shape_cast %29 : vector<1xf32> to vector<1x1x1xf32>
    %31 = vector.extract %30[0, 0, 0] : f32 from vector<1x1x1xf32>
    %cst_16 = arith.constant 1.250000e-01 : f32
    %32 = arith.mulf %31, %cst_16 : f32
    %c4_i32_17 = arith.constant 4 : i32
    %33 = vector.broadcast %c4_i32_17 : i32 to vector<2x128xi32>
    %34 = arith.cmpi eq, %23, %33 : vector<2x128xi32>
    %cst_18 = arith.constant 0.000000e+00 : f32
    %35 = vector.broadcast %cst_18 : f32 to vector<2x128xf32>
    %36 = arith.select %34, %22, %35 : vector<2x128xi1>, vector<2x128xf32>
    %cst_19 = arith.constant dense<0.000000e+00> : vector<2xf32>
    %37 = vector.multi_reduction <add>, %36, %cst_19 [1] : vector<2x128xf32> to vector<2xf32>
    %38 = vector.shape_cast %37 : vector<2xf32> to vector<2x1xf32>
    %39 = vector.broadcast %38 : vector<2x1xf32> to vector<2x128xf32>
    %40 = arith.addf %22, %39 : vector<2x128xf32>
    %41 = vector.broadcast %32 : f32 to vector<2x128xf32>
    %42 = arith.subf %40, %41 : vector<2x128xf32>
    %c0_20 = arith.constant 0 : index
    %c0_21 = arith.constant 0 : index
    %c0_22 = arith.constant 0 : index
    %43 = vector.load %arg5[%c0_20, %c0_21, %c0_22] : memref<1x2x128xf32, #tpu.memory_space<vmem>>, vector<1x2x128xf32>
    %44 = vector.shape_cast %43 : vector<1x2x128xf32> to vector<2x128xf32>
    %45 = vector.shape_cast %42 : vector<2x128xf32> to vector<1x2x128xf32>
    tpu.vector_store %arg5[%c0_20, %c0_21, %c0_22], %45 {strides = array<i32>} : memref<1x2x128xf32, #tpu.memory_space<vmem>>, vector<1x2x128xf32>,
    return
  }
  func.func @transform_0(%arg0: i32) -> (i32, i32, i32) {
    %c0_i32 = arith.constant 0 : i32
    %c0_i32_0 = arith.constant 0 : i32
    %c0_i32_1 = arith.constant 0 : i32
    return %arg0, %c0_i32, %c0_i32_0 : i32, i32, i32
  }
  func.func @transform_1(%arg0: i32) -> (i32, i32) {
    %c0_i32 = arith.constant 0 : i32
    %c0_i32_0 = arith.constant 0 : i32
    %c0_i32_1 = arith.constant 0 : i32
    return %c0_i32, %c0_i32_0 : i32, i32
  }
  func.func @transform_2(%arg0: i32) -> (i32, i32) {
    %c0_i32 = arith.constant 0 : i32
    %c0_i32_0 = arith.constant 0 : i32
    %c0_i32_1 = arith.constant 0 : i32
    return %c0_i32, %c0_i32_0 : i32, i32
  }
  func.func @transform_3(%arg0: i32) -> (i32, i32) {
    %c0_i32 = arith.constant 0 : i32
    %c0_i32_0 = arith.constant 0 : i32
    %c0_i32_1 = arith.constant 0 : i32
    return %c0_i32, %c0_i32_0 : i32, i32
  }
  func.func @transform_4(%arg0: i32) -> (i32, i32, i32) {
    %c0_i32 = arith.constant 0 : i32
    %c0_i32_0 = arith.constant 0 : i32
    %c0_i32_1 = arith.constant 0 : i32
    return %arg0, %c0_i32, %c0_i32_0 : i32, i32, i32
  }
}

</mosaic_0001>

<llo_original>
// kernel: tpu_custom_call.1
$region0: #{tpu_custom_call.1}
  #allocation0 [shape = 'u32[]', space=smem, size = 0x4, offset = 0x4, fixed_abs, tag = 'smem constant byte address 0x4 - core index']
  #allocation1 [shape = 'u32[144,128]{1,0:T(1,128)}', space=vmem, size = 0x12000, scoped, tag = 'internal scratch']
  %s0 = inlined_call_operand.hbm [shape: f32[1,2,16], index: 0, kind: input, shape index: {}]
  %s1 = inlined_call_operand.hbm [shape: bf16[144,256], index: 1, kind: input, shape index: {}]
  %s2 = inlined_call_operand.hbm [shape: bf16[256,128], index: 2, kind: input, shape index: {}]
  %s3 = inlined_call_operand.vmem [shape: bf16[2,256], index: 3, kind: input, shape index: {}]
  %s4 = inlined_call_operand.hbm [shape: f32[1,2,128], index: 4, kind: output, shape index: {}]
  %s5 = sld [smem:[#allocation0]]
  $region38: #{tpu_custom_call.1} parent=0
    _
  %s7 = ssub.s32 1, %s5
  %s8 = scalar_select 0, %s7, %s5
  $region1: #{tpu_custom_call.1} parent=0
    #allocation2 [shape = 'u8[1024]{0}', space=vmem, size = 0x400, scoped, tag = 'input window, operand 0, single buffered']
    #allocation3 [shape = 's32[1]{0}', space=sflag, size = 0x4, scoped, tag = 'scoped memory for tpu_custom_call.1']
    #allocation4 [shape = 's32[1]{0}', space=sflag, size = 0x4, scoped, tag = 'scoped memory for tpu_custom_call.1']
    #allocation5 [shape = 'u8[73728]{0}', space=vmem, size = 0x12000, scoped, tag = 'input window, operand 1, single buffered']
    #allocation6 [shape = 's32[1]{0}', space=sflag, size = 0x4, scoped, tag = 'scoped memory for tpu_custom_call.1']
    #allocation7 [shape = 'u8[65536]{0}', space=vmem, size = 0x10000, scoped, tag = 'input window, operand 2, single buffered']
    #allocation8 [shape = 'u8[1024]{0}', space=vmem, size = 0x400, scoped, tag = 'output window, operand 0, single buffered']
    %9 = vsyncpa [#allocation3], 0
    %10 = vsyncpa [#allocation6], 0
    %11 = vsyncpa [#allocation4], 0
    // Predicated region
    $region2: #{tpu_custom_call.1} parent=1 // pred_check
      _
    $region3: #{tpu_custom_call.1} parent=1 // pred_check_branch
      %13 = sbr.rel (0) target = $region5
    $region4: #{tpu_custom_call.1} parent=1 // pred_region
      %s15 = ssub.s32 32, 32
      %16 = vsyncadd [#allocation3], %s15
      %s18 = sshll.u32 [#allocation2], 4
      %s19 = int_to_ptr.vmem [resolvable:$true] %s18
      %21 = dma.hbm_to_vmem [thread:$0]  %s0, 32, %s19, [#allocation3]
    $region5: #{tpu_custom_call.1} parent=1 // pred_fallthru
      _
    // Predicated region
    $region6: #{tpu_custom_call.1} parent=1 // pred_check
      _
    $region7: #{tpu_custom_call.1} parent=1 // pred_check_branch
      %23 = sbr.rel (0) target = $region9
    $region8: #{tpu_custom_call.1} parent=1 // pred_region
      %s25 = ssub.s32 2304, 2304
      %26 = vsyncadd [#allocation6], %s25
      %s27 = sshll.u32 [#allocation5], 4
      %s28 = int_to_ptr.vmem [resolvable:$true] %s27
      %33 = dma.hbm_to_vmem [thread:$0]  %s1, 2304, %s28, [#allocation6], 128, 128, 8
    $region9: #{tpu_custom_call.1} parent=1 // pred_fallthru
      _
    // Predicated region
    $region10: #{tpu_custom_call.1} parent=1 // pred_check
      _
    $region11: #{tpu_custom_call.1} parent=1 // pred_check_branch
      %35 = sbr.rel (0) target = $region13
    $region12: #{tpu_custom_call.1} parent=1 // pred_region
      %s37 = ssub.s32 2048, 2048
      %38 = vsyncadd [#allocation6], %s37
      %s39 = sshll.u32 [#allocation7], 4
      %s40 = int_to_ptr.vmem [resolvable:$true] %s39
      %45 = dma.hbm_to_vmem [thread:$0]  %s2, 2048, %s40, [#allocation6], 64, 64, 4
    $region13: #{tpu_custom_call.1} parent=1 // pred_fallthru
      _
    // Predicated region
    $region14: #{tpu_custom_call.1} parent=1 // pred_check
      _
    $region15: #{tpu_custom_call.1} parent=1 // pred_check_branch
      %47 = sbr.rel (0) target = $region17
    $region16: #{tpu_custom_call.1} parent=1 // pred_region
      _
    $region17: #{tpu_custom_call.1} parent=1 // pred_fallthru
      _
    // Predicated region
    $region18: #{tpu_custom_call.1} parent=1 // pred_check
      _
    $region19: #{tpu_custom_call.1} parent=1 // pred_check_branch
      %49 = sbr.rel (0) target = $region21
    $region20: #{tpu_custom_call.1} parent=1 // pred_region
      %50 = dma.done [#allocation3], 32
    $region21: #{tpu_custom_call.1} parent=1 // pred_fallthru
      _
    // Predicated region
    $region22: #{tpu_custom_call.1} parent=1 // pred_check
      _
    $region23: #{tpu_custom_call.1} parent=1 // pred_check_branch
      %52 = sbr.rel (0) target = $region25
    $region24: #{tpu_custom_call.1} parent=1 // pred_region
      %53 = dma.done [#allocation6], 2304
    $region25: #{tpu_custom_call.1} parent=1 // pred_fallthru
      _
    // Predicated region
    $region26: #{tpu_custom_call.1} parent=1 // pred_check
      _
    $region27: #{tpu_custom_call.1} parent=1 // pred_check_branch
      %55 = sbr.rel (0) target = $region29
    $region28: #{tpu_custom_call.1} parent=1 // pred_region
      %56 = dma.done [#allocation6], 2048
    $region29: #{tpu_custom_call.1} parent=1 // pred_fallthru
      _
    %v57 = vld [vmem:[#allocation2] sm:$0x3]
    %v58 = vld [vmem:[#allocation5] sm:$0xf]
    %v59 = vld [vmem:[#allocation5 + $0x8] sm:$0xf]
    %v60 = vunpack.c.l.bf16 %v58
    %v61 = vunpack.c.l.bf16 %v59
    %v62 = vld [vmem:[#allocation5 + $0x10] sm:$0xff]
    %v63 = vld [vmem:[#allocation5 + $0x18] sm:$0xff]
    %v64 = vld [vmem:[#allocation5 + $0x20] sm:$0xff]
    %v65 = vld [vmem:[#allocation5 + $0x28] sm:$0xff]
    %v66 = vld [vmem:[#allocation5 + $0x30] sm:$0xff]
    %v67 = vld [vmem:[#allocation5 + $0x38] sm:$0xff]
    %v68 = vld [vmem:[#allocation5 + $0x40] sm:$0xff]
    %v69 = vld [vmem:[#allocation5 + $0x48] sm:$0xff]
    %v70 = vld [vmem:[#allocation5 + $0x50] sm:$0xff]
    %v71 = vld [vmem:[#allocation5 + $0x58] sm:$0xff]
    %v72 = vld [vmem:[#allocation5 + $0x60] sm:$0xff]
    %v73 = vld [vmem:[#allocation5 + $0x68] sm:$0xff]
    %v74 = vld [vmem:[#allocation5 + $0x70] sm:$0xff]
    %v75 = vld [vmem:[#allocation5 + $0x78] sm:$0xff]
    %v76 = vld [vmem:[#allocation5 + $0x80] sm:$0xff]
    %v77 = vld [vmem:[#allocation5 + $0x88] sm:$0xff]
    %v78 = vunpack.c.l.bf16 %v62
    %v79 = vunpack.c.h.bf16 %v62
    %v80 = vunpack.c.l.bf16 %v63
    %v81 = vunpack.c.h.bf16 %v63
    %v82 = vunpack.c.l.bf16 %v64
    %v83 = vunpack.c.h.bf16 %v64
    %v84 = vunpack.c.l.bf16 %v65
    %v85 = vunpack.c.h.bf16 %v65
    %v86 = vunpack.c.l.bf16 %v66
    %v87 = vunpack.c.h.bf16 %v66
    %v88 = vunpack.c.l.bf16 %v67
    %v89 = vunpack.c.h.bf16 %v67
    %v90 = vunpack.c.l.bf16 %v68
    %v91 = vunpack.c.h.bf16 %v68
    %v92 = vunpack.c.l.bf16 %v69
    %v93 = vunpack.c.h.bf16 %v69
    %v94 = vunpack.c.l.bf16 %v70
    %v95 = vunpack.c.h.bf16 %v70
    %v96 = vunpack.c.l.bf16 %v71
    %v97 = vunpack.c.h.bf16 %v71
    %v98 = vunpack.c.l.bf16 %v72
    %v99 = vunpack.c.h.bf16 %v72
    %v100 = vunpack.c.l.bf16 %v73
    %v101 = vunpack.c.h.bf16 %v73
    %v102 = vunpack.c.l.bf16 %v74
    %v103 = vunpack.c.h.bf16 %v74
    %v104 = vunpack.c.l.bf16 %v75
    %v105 = vunpack.c.h.bf16 %v75
    %v106 = vunpack.c.l.bf16 %v76
    %v107 = vunpack.c.h.bf16 %v76
    %v108 = vunpack.c.l.bf16 %v77
    %v109 = vunpack.c.h.bf16 %v77
    %v110 = vld [vmem:[#allocation7] sm:$0xf]
    %v111 = vld [vmem:[#allocation7 + $0x4] sm:$0xf]
    %v112 = vld [vmem:[#allocation7 + $0x8] sm:$0xf]
    %v113 = vld [vmem:[#allocation7 + $0xc] sm:$0xf]
    %v114 = vld [vmem:[#allocation7 + $0x10] sm:$0xf]
    %v115 = vld [vmem:[#allocation7 + $0x14] sm:$0xf]
    %v116 = vld [vmem:[#allocation7 + $0x18] sm:$0xf]
    %v117 = vld [vmem:[#allocation7 + $0x1c] sm:$0xf]
    %v118 = vld [vmem:[#allocation7 + $0x20] sm:$0xf]
    %v119 = vld [vmem:[#allocation7 + $0x24] sm:$0xf]
    %v120 = vld [vmem:[#allocation7 + $0x28] sm:$0xf]
    %v121 = vld [vmem:[#allocation7 + $0x2c] sm:$0xf]
    %v122 = vld [vmem:[#allocation7 + $0x30] sm:$0xf]
    %v123 = vld [vmem:[#allocation7 + $0x34] sm:$0xf]
    %v124 = vld [vmem:[#allocation7 + $0x38] sm:$0xf]
    %v125 = vld [vmem:[#allocation7 + $0x3c] sm:$0xf]
    %v126 = vld [vmem:[#allocation7 + $0x40] sm:$0xf]
    %v127 = vld [vmem:[#allocation7 + $0x44] sm:$0xf]
    %v128 = vld [vmem:[#allocation7 + $0x48] sm:$0xf]
    %v129 = vld [vmem:[#allocation7 + $0x4c] sm:$0xf]
    %v130 = vld [vmem:[#allocation7 + $0x50] sm:$0xf]
    %v131 = vld [vmem:[#allocation7 + $0x54] sm:$0xf]
    %v132 = vld [vmem:[#allocation7 + $0x58] sm:$0xf]
    %v133 = vld [vmem:[#allocation7 + $0x5c] sm:$0xf]
    %v134 = vld [vmem:[#allocation7 + $0x60] sm:$0xf]
    %v135 = vld [vmem:[#allocation7 + $0x64] sm:$0xf]
    %v136 = vld [vmem:[#allocation7 + $0x68] sm:$0xf]
    %v137 = vld [vmem:[#allocation7 + $0x6c] sm:$0xf]
    %v138 = vld [vmem:[#allocation7 + $0x70] sm:$0xf]
    %v139 = vld [vmem:[#allocation7 + $0x74] sm:$0xf]
    %v140 = vld [vmem:[#allocation7 + $0x78] sm:$0xf]
    %v141 = vld [vmem:[#allocation7 + $0x7c] sm:$0xf]
    %v142 = vunpack.c.l.bf16 %v110
    %v143 = vunpack.c.l.bf16 %v111
    %v144 = vunpack.c.l.bf16 %v112
    %v145 = vunpack.c.l.bf16 %v113
    %v146 = vunpack.c.l.bf16 %v114
    %v147 = vunpack.c.l.bf16 %v115
    %v148 = vunpack.c.l.bf16 %v116
    %v149 = vunpack.c.l.bf16 %v117
    %v150 = vunpack.c.l.bf16 %v118
    %v151 = vunpack.c.l.bf16 %v119
    %v152 = vunpack.c.l.bf16 %v120
    %v153 = vunpack.c.l.bf16 %v121
    %v154 = vunpack.c.l.bf16 %v122
    %v155 = vunpack.c.l.bf16 %v123
    %v156 = vunpack.c.l.bf16 %v124
    %v157 = vunpack.c.l.bf16 %v125
    %v158 = vunpack.c.l.bf16 %v126
    %v159 = vunpack.c.l.bf16 %v127
    %v160 = vunpack.c.l.bf16 %v128
    %v161 = vunpack.c.l.bf16 %v129
    %v162 = vunpack.c.l.bf16 %v130
    %v163 = vunpack.c.l.bf16 %v131
    %v164 = vunpack.c.l.bf16 %v132
    %v165 = vunpack.c.l.bf16 %v133
    %v166 = vunpack.c.l.bf16 %v134
    %v167 = vunpack.c.l.bf16 %v135
    %v168 = vunpack.c.l.bf16 %v136
    %v169 = vunpack.c.l.bf16 %v137
    %v170 = vunpack.c.l.bf16 %v138
    %v171 = vunpack.c.l.bf16 %v139
    %v172 = vunpack.c.l.bf16 %v140
    %v173 = vunpack.c.l.bf16 %v141
    %v174 = vld [vmem:[%s3] sm:$0x3]
    %v175 = vunpack.c.l.bf16 %v174
    %v176 = vld [vmem:[%s3] sm:$0x1]
    %v177 = vunpack.c.l.bf16 %v176
    %vm178 = vcmask 130048
    %v180 = vsel %vm178, %v57, 0
    %182 = vmatprep.subr.mxu0 0.0
    %183 = vmatpush1.msra.mxu0 %v60
    %184 = vmatprep.subr.mxu0 0.0
    %185 = vmatpush1.msra.mxu0 %v61
    %186 = vmatprep.subr.mxu0 0.0
    %187 = vmatpush1.msra.mxu0 0.0
    %188 = vmatprep.subr.mxu0 0.0
    %189 = vmatpush1.msra.mxu0 0.0
    %190 = vmatprep.subr.mxu0 0.0
    %191 = vmatpush1.msra.mxu0 0.0
    %192 = vmatprep.subr.mxu0 0.0
    %193 = vmatpush1.msra.mxu0 0.0
    %194 = vmatprep.subr.mxu0 0.0
    %195 = vmatpush1.msra.mxu0 0.0
    %196 = vmatprep.subr.mxu0 0.0
    %197 = vmatpush1.msra.mxu0 0.0
    %198 = vmatprep.subr.mxu0 0.0
    %199 = vmatpush1.msra.mxu0 0.0
    %200 = vmatprep.subr.mxu0 0.0
    %201 = vmatpush1.msra.mxu0 0.0
    %202 = vmatprep.subr.mxu0 0.0
    %203 = vmatpush1.msra.mxu0 0.0
    %204 = vmatprep.subr.mxu0 0.0
    %205 = vmatpush1.msra.mxu0 0.0
    %206 = vmatprep.subr.mxu0 0.0
    %207 = vmatpush1.msra.mxu0 0.0
    %208 = vmatprep.subr.mxu0 0.0
    %209 = vmatpush1.msra.mxu0 0.0
    %210 = vmatprep.subr.mxu0 0.0
    %211 = vmatpush1.msra.mxu0 0.0
    %212 = vmatprep.subr.mxu0 0.0
    %213 = vmatpush1.msra.mxu0 0.0
    %214 = vmatprep.subr.mxu0 0.0
    %215 = vmatpush1.msra.mxu0 0.0
    %216 = vmatprep.subr.mxu0 0.0
    %217 = vmatpush1.msra.mxu0 0.0
    %218 = vmatprep.subr.mxu0 0.0
    %219 = vmatpush1.msra.mxu0 0.0
    %220 = vmatprep.subr.mxu0 0.0
    %221 = vmatpush1.msra.mxu0 0.0
    %222 = vmatprep.subr.mxu0 0.0
    %223 = vmatpush1.msra.mxu0 0.0
    %224 = vmatprep.subr.mxu0 0.0
    %225 = vmatpush1.msra.mxu0 0.0
    %226 = vmatprep.subr.mxu0 0.0
    %227 = vmatpush1.msra.mxu0 0.0
    %228 = vmatprep.subr.mxu0 0.0
    %229 = vmatpush1.msra.mxu0 0.0
    %230 = vmatprep.subr.mxu0 0.0
    %231 = vmatpush1.msra.mxu0 0.0
    %232 = vmatprep.subr.mxu0 0.0
    %233 = vmatpush1.msra.mxu0 0.0
    %234 = vmatprep.subr.mxu0 0.0
    %235 = vmatpush1.msra.mxu0 0.0
    %236 = vmatprep.subr.mxu0 0.0
    %237 = vmatpush1.msra.mxu0 0.0
    %238 = vmatprep.subr.mxu0 0.0
    %239 = vmatpush1.msra.mxu0 0.0
    %240 = vmatprep.subr.mxu0 0.0
    %241 = vmatpush1.msra.mxu0 0.0
    %242 = vmatprep.subr.mxu0 0.0
    %243 = vmatpush1.msra.mxu0 0.0
    %244 = vmatprep.subr.mxu0 0.0
    %245 = vmatpush1.msra.mxu0 0.0
    %246 = vmatprep.mubr.f32.mxu0 0.0
    %247 = vmatmul.mubr.f32.gmra.mrb[0].mxu0 %v180
    %v248 = vpop.f32.mrb[0].mxu0
    %v249 = vadd.f32 0.0, %v248
    %v250 = vpop.f32.mrb[0].mxu0
    %251 = vdwg.mxu0
    %v252 = vmax.f32 %v249, 0.0
    %v254 = vlaneseq
    %v255 = vshrl.u32 %v254, 7
    %v256 = vsub.s32 0, %v255
    %v257 = vrot.slane %v175, %v256
    %v258 = vlaneseq
    %v259 = vshrl.u32 %v258, 7
    %v260 = vsub.s32 2, %v259
    %v261 = vrot.slane %v175, %v260
    %v264 = vlaneseq
    %v265 = vshrl.u32 %v264, 7
    %v266 = vsub.s32 0, %v265
    %v267 = vrot.slane %v257, %v266
    %v268 = vlaneseq
    %v269 = vshrl.u32 %v268, 7
    %v270 = vsub.s32 0, %v269
    %v271 = vrot.slane %v261, %v270
    %272 = vmatprep.subr.mxu0 %v79
    %273 = vmatpush1.msra.mxu0 %v78
    %274 = vmatprep.subr.mxu0 %v81
    %275 = vmatpush1.msra.mxu0 %v80
    %276 = vmatprep.subr.mxu0 %v83
    %277 = vmatpush1.msra.mxu0 %v82
    %278 = vmatprep.subr.mxu0 %v85
    %279 = vmatpush1.msra.mxu0 %v84
    %280 = vmatprep.subr.mxu0 %v87
    %281 = vmatpush1.msra.mxu0 %v86
    %282 = vmatprep.subr.mxu0 %v89
    %283 = vmatpush1.msra.mxu0 %v88
    %284 = vmatprep.subr.mxu0 %v91
    %285 = vmatpush1.msra.mxu0 %v90
    %286 = vmatprep.subr.mxu0 %v93
    %287 = vmatpush1.msra.mxu0 %v92
    %288 = vmatprep.subr.mxu0 %v95
    %289 = vmatpush1.msra.mxu0 %v94
    %290 = vmatprep.subr.mxu0 %v97
    %291 = vmatpush1.msra.mxu0 %v96
    %292 = vmatprep.subr.mxu0 %v99
    %293 = vmatpush1.msra.mxu0 %v98
    %294 = vmatprep.subr.mxu0 %v101
    %295 = vmatpush1.msra.mxu0 %v100
    %296 = vmatprep.subr.mxu0 %v103
    %297 = vmatpush1.msra.mxu0 %v102
    %298 = vmatprep.subr.mxu0 %v105
    %299 = vmatpush1.msra.mxu0 %v104
    %300 = vmatprep.subr.mxu0 %v107
    %301 = vmatpush1.msra.mxu0 %v106
    %302 = vmatprep.subr.mxu0 %v109
    %303 = vmatpush1.msra.mxu0 %v108
    %304 = vmatprep.subr.mxu0 0.0
    %305 = vmatpush1.msra.mxu0 0.0
    %306 = vmatprep.subr.mxu0 0.0
    %307 = vmatpush1.msra.mxu0 0.0
    %308 = vmatprep.subr.mxu0 0.0
    %309 = vmatpush1.msra.mxu0 0.0
    %310 = vmatprep.subr.mxu0 0.0
    %311 = vmatpush1.msra.mxu0 0.0
    %312 = vmatprep.subr.mxu0 0.0
    %313 = vmatpush1.msra.mxu0 0.0
    %314 = vmatprep.subr.mxu0 0.0
    %315 = vmatpush1.msra.mxu0 0.0
    %316 = vmatprep.subr.mxu0 0.0
    %317 = vmatpush1.msra.mxu0 0.0
    %318 = vmatprep.subr.mxu0 0.0
    %319 = vmatpush1.msra.mxu0 0.0
    %320 = vmatprep.subr.mxu0 0.0
    %321 = vmatpush1.msra.mxu0 0.0
    %322 = vmatprep.subr.mxu0 0.0
    %323 = vmatpush1.msra.mxu0 0.0
    %324 = vmatprep.subr.mxu0 0.0
    %325 = vmatpush1.msra.mxu0 0.0
    %326 = vmatprep.subr.mxu0 0.0
    %327 = vmatpush1.msra.mxu0 0.0
    %328 = vmatprep.subr.mxu0 0.0
    %329 = vmatpush1.msra.mxu0 0.0
    %330 = vmatprep.subr.mxu0 0.0
    %331 = vmatpush1.msra.mxu0 0.0
    %332 = vmatprep.subr.mxu0 0.0
    %333 = vmatpush1.msra.mxu0 0.0
    %334 = vmatprep.subr.mxu0 0.0
    %335 = vmatpush1.msra.mxu0 0.0
    %336 = vmatprep.mubr.f32.mxu0 0.0
    %337 = vmatmul.mubr.f32.gmra.mrb[0].mxu0 %v252
    %v338 = vpop.f32.mrb[0].mxu0
    %v339 = vadd.f32 %v267, %v338
    %v340 = vpop.f32.mrb[0].mxu0
    %v341 = vadd.f32 %v271, %v340
    %342 = vdwg.mxu0
    %v343 = vmax.f32 %v339, 0.0
    %v344 = vmax.f32 %v341, 0.0
    %v345 = vlaneseq
    %v346 = vshrl.u32 %v345, 7
    %v347 = vsub.s32 1, %v346
    %v348 = vrot.slane %v177, %v347
    %349 = vmatprep.subr.mxu0 0.0
    %350 = vmatpush1.msra.mxu0 %v142
    %351 = vmatprep.subr.mxu0 0.0
    %352 = vmatpush1.msra.mxu0 %v143
    %353 = vmatprep.subr.mxu0 0.0
    %354 = vmatpush1.msra.mxu0 %v144
    %355 = vmatprep.subr.mxu0 0.0
    %356 = vmatpush1.msra.mxu0 %v145
    %357 = vmatprep.subr.mxu0 0.0
    %358 = vmatpush1.msra.mxu0 %v146
    %359 = vmatprep.subr.mxu0 0.0
    %360 = vmatpush1.msra.mxu0 %v147
    %361 = vmatprep.subr.mxu0 0.0
    %362 = vmatpush1.msra.mxu0 %v148
    %363 = vmatprep.subr.mxu0 0.0
    %364 = vmatpush1.msra.mxu0 %v149
    %365 = vmatprep.subr.mxu0 0.0
    %366 = vmatpush1.msra.mxu0 %v150
    %367 = vmatprep.subr.mxu0 0.0
    %368 = vmatpush1.msra.mxu0 %v151
    %369 = vmatprep.subr.mxu0 0.0
    %370 = vmatpush1.msra.mxu0 %v152
    %371 = vmatprep.subr.mxu0 0.0
    %372 = vmatpush1.msra.mxu0 %v153
    %373 = vmatprep.subr.mxu0 0.0
    %374 = vmatpush1.msra.mxu0 %v154
    %375 = vmatprep.subr.mxu0 0.0
    %376 = vmatpush1.msra.mxu0 %v155
    %377 = vmatprep.subr.mxu0 0.0
    %378 = vmatpush1.msra.mxu0 %v156
    %379 = vmatprep.subr.mxu0 0.0
    %380 = vmatpush1.msra.mxu0 %v157
    %381 = vmatprep.subr.mxu0 0.0
    %382 = vmatpush1.msra.mxu0 %v158
    %383 = vmatprep.subr.mxu0 0.0
    %384 = vmatpush1.msra.mxu0 %v159
    %385 = vmatprep.subr.mxu0 0.0
    %386 = vmatpush1.msra.mxu0 %v160
    %387 = vmatprep.subr.mxu0 0.0
    %388 = vmatpush1.msra.mxu0 %v161
    %389 = vmatprep.subr.mxu0 0.0
    %390 = vmatpush1.msra.mxu0 %v162
    %391 = vmatprep.subr.mxu0 0.0
    %392 = vmatpush1.msra.mxu0 %v163
    %393 = vmatprep.subr.mxu0 0.0
    %394 = vmatpush1.msra.mxu0 %v164
    %395 = vmatprep.subr.mxu0 0.0
    %396 = vmatpush1.msra.mxu0 %v165
    %397 = vmatprep.subr.mxu0 0.0
    %398 = vmatpush1.msra.mxu0 %v166
    %399 = vmatprep.subr.mxu0 0.0
    %400 = vmatpush1.msra.mxu0 %v167
    %401 = vmatprep.subr.mxu0 0.0
    %402 = vmatpush1.msra.mxu0 %v168
    %403 = vmatprep.subr.mxu0 0.0
    %404 = vmatpush1.msra.mxu0 %v169
    %405 = vmatprep.subr.mxu0 0.0
    %406 = vmatpush1.msra.mxu0 %v170
    %407 = vmatprep.subr.mxu0 0.0
    %408 = vmatpush1.msra.mxu0 %v171
    %409 = vmatprep.subr.mxu0 0.0
    %410 = vmatpush1.msra.mxu0 %v172
    %411 = vmatprep.subr.mxu0 0.0
    %412 = vmatpush1.msra.mxu0 %v173
    %413 = vmatprep.mubr.f32.mxu0 %v344
    %414 = vmatmul.mubr.f32.gmra.mrb[0].mxu0 %v343
    %v415 = vpop.f32.mrb[0].mxu0
    %v416 = vadd.f32 %v348, %v415
    %v417 = vpop.f32.mrb[0].mxu0
    %418 = vdwg.mxu0
    %v419 = vlaneseq
    %v420 = vand.u32 %v419, 127
    %vm421 = vcmp.lt.s32.totalorder %v420, 4
    %v422 = vsel %vm421, %v416, 0.0
    %vm423 = vcmask 1041408
    %v424 = vsel %vm423, %v422, 0.0
    %425 = vadd.xlane.f32.xlu0 %v424
    %v426 = vpop.xlane.xlu0 %425
    %v427 = vrot.slane %v426, 4
    %v428 = vadd.f32 %v426, %v427
    %v429 = vrot.slane %v428, 2
    %v430 = vadd.f32 %v428, %v429
    %v431 = vrot.slane %v430, 1
    %v432 = vadd.f32 %v430, %v431
    %s433 = vtos %v432
    %s434 = smul.f32 %s433, 0.125
    %vm435 = vcmp.eq.s32.totalorder %v420, 4
    %v436 = vsel %vm435, %v416, 0.0
    %v437 = vsel %vm423, %v436, 0.0
    %438 = vadd.xlane.f32.xlu0 %v437
    %v439 = vpop.xlane.xlu0 %438
    %v440 = vadd.f32 %v416, %v439
    %v441 = vstv %s434
    %v442 = vsub.f32 %v440, %v441
    %443 = vst [vmem:[#allocation8] sm:$0x3] %v442
    // Predicated region
    $region30: #{tpu_custom_call.1} parent=1 // pred_check
      _
    $region31: #{tpu_custom_call.1} parent=1 // pred_check_branch
      %445 = sbr.rel (0) target = $region33
    $region32: #{tpu_custom_call.1} parent=1 // pred_region
      %s447 = ssub.s32 32, 32
      %448 = vsyncadd [#allocation4], %s447
      %s450 = sshll.u32 [#allocation8], 4
      %s451 = int_to_ptr.vmem [resolvable:$true] %s450
      %453 = dma.vmem_to_hbm [thread:$0]  %s451, 32, %s4, [#allocation4]
    $region33: #{tpu_custom_call.1} parent=1 // pred_fallthru
      _
    // Predicated region
    $region34: #{tpu_custom_call.1} parent=1 // pred_check
      _
    $region35: #{tpu_custom_call.1} parent=1 // pred_check_branch
      %455 = sbr.rel (0) target = $region37
    $region36: #{tpu_custom_call.1} parent=1 // pred_region
      %456 = dma.done [#allocation4], 32
    $region37: #{tpu_custom_call.1} parent=1 // pred_fallthru
      _
    %457 = vsyncpa [#allocation3], 1
    %458 = vsyncpa [#allocation6], 1
    %459 = vsyncpa [#allocation4], 1

</llo_original>
